<compile_context>
chip_gen: v7x
topology: tpu7x:2x2x1
jax: 0.10.0
libtpu: 0.0.40
codegen_flags: <defaults>
</compile_context>

<pallas_src>
import functools

import jax
import jax.numpy as jnp
from jax.experimental import pallas as pl
from jax.experimental.pallas import tpu as pltpu


_SMALL_N = 512          # single/dual-invocation fast-path threshold
_PAD_QUANTUM = 256      # padding granularity for ragged sizes


# ---------------------------------------------------------------------------
# Chip / tile selection
# ---------------------------------------------------------------------------

def _device_kind():
    try:
        return jax.devices()[0].device_kind.lower()
    except Exception:
        return ""


def _tile_candidates(kind):
    # v6e: 128 MiB VMEM + highest flops/byte requirement -> allow 1024 tiles.
    # v7x: 64 MiB VMEM, 3.2 TB/s HBM -> 512 tiles already compute-bound,
    #      bigger tiles just burn VMEM headroom.
    # v5e / unknown: 512 tiles (~7 MiB working set) fit the 16 MiB scoped
    #      default without any flag overrides.
    if "v6" in kind:
        return (1024, 512, 256)
    return (512, 256)


def _select_tile(n, kind):
    """Pick (tile, padded_n).  Never returns tiles < 256: sizes not divisible
    by 256 go through the padding path instead of a 128-wide-tile grid."""
    cands = _tile_candidates(kind)
    for t in cands:
        # Only use >512 tiles when the grid is at least 2x2 output blocks.
        if n % t == 0 and (t <= 512 or n >= 2 * t):
            return t, n
    n_pad = pl.cdiv(n, _PAD_QUANTUM) * _PAD_QUANTUM
    for t in cands:
        if n_pad % t == 0 and (t <= 512 or n_pad >= 2 * t):
            return t, n_pad
    return _PAD_QUANTUM, n_pad


def _pair_tables(nj, nk, tn, tk, triangular):
    """Flattened (j, k) block pairs; triangular=True keeps only pairs whose
    R block (k, j) has nonzero content (k*tk <= (j+1)*tn - 1)."""
    js, ks = [], []
    for j in range(nj):
        k_hi = min(((j + 1) * tn - 1) // tk, nk - 1) if triangular else nk - 1
        for k in range(k_hi + 1):
            js.append(j)
            ks.append(k)
    return (jnp.asarray(js, dtype=jnp.int32), jnp.asarray(ks, dtype=jnp.int32))


# ---------------------------------------------------------------------------
# Kernels
# ---------------------------------------------------------------------------

def _matmul_small_kernel(q_ref, r_ref, o_ref):
    """Whole-matrix (or half-matrix per core on v7x) matmul, no accumulator."""
    o_ref[...] = jnp.dot(
        q_ref[...], r_ref[...], preferred_element_type=jnp.float32
    ).astype(o_ref.dtype)


def _qr_flat_kernel(j_tab_ref, k_tab_ref, q_ref, r_ref, o_ref, acc_ref,
                    *, tn, tk, nk, triangular):
    """Tiled matmul over a flattened (j, k) pair grid.

    Grid = (M//tm, num_pairs).  For each j-run the pairs are consecutive and
    start at k == 0, so the accumulator init fires at k == 0 and the store
    fires at the last contributing k for that j (computed analytically)."""
    p = pl.program_id(1)
    k = k_tab_ref[p]

    @pl.when(k == 0)
    def _init():
        acc_ref[...] = jnp.zeros_like(acc_ref)

    acc_ref[...] += jnp.dot(
        q_ref[...], r_ref[...], preferred_element_type=jnp.float32
    )

    if triangular:
        j = j_tab_ref[p]
        k_last = jnp.minimum(((j + 1) * tn - 1) // tk, nk - 1)
    else:
        k_last = nk - 1

    @pl.when(k == k_last)
    def _store():
        o_ref[...] = acc_ref[...].astype(o_ref.dtype)


# ---------------------------------------------------------------------------
# Wrappers
# ---------------------------------------------------------------------------

def _small_matmul(Q, R, out_dtype, kind):
    M, K = Q.shape
    _, N = R.shape
    # On v7x (2 TensorCores/chip) split M over both cores; elsewhere a single
    # grid step avoids all pipeline machinery.
    split = 2 if ("v7" in kind and M >= 256 and M % 16 == 0) else 1
    bm = M // split
    itemsize = jnp.dtype(Q.dtype).itemsize
    return pl.pallas_call(
        _matmul_small_kernel,
        out_shape=jax.ShapeDtypeStruct((M, N), out_dtype),
        grid=(split,),
        in_specs=[
            pl.BlockSpec((bm, K), lambda i: (i, 0)),
            pl.BlockSpec((K, N), lambda i: (0, 0)),
        ],
        out_specs=pl.BlockSpec((bm, N), lambda i: (i, 0)),
        compiler_params=pltpu.CompilerParams(
            dimension_semantics=("parallel",)),
        cost_estimate=pl.CostEstimate(
            flops=2 * M * N * K,
            transcendentals=0,
            bytes_accessed=(M * K + K * N) * itemsize
            + M * N * jnp.dtype(out_dtype).itemsize),
    )(Q, R)


def _tiled_matmul(Q, R, tm, tn, tk, *, out_dtype, triangular, kind):
    M, K = Q.shape
    _, N = R.shape
    nj, nk = N // tn, K // tk

    j_tab, k_tab = _pair_tables(nj, nk, tn, tk, triangular)
    num_pairs = int(j_tab.shape[0])

    kernel = functools.partial(
        _qr_flat_kernel, tn=tn, tk=tk, nk=nk, triangular=triangular)

    def q_map(i, p, j_t, k_t):
        return (i, k_t[p])

    def r_map(i, p, j_t, k_t):
        return (k_t[p], j_t[p])

    def o_map(i, p, j_t, k_t):
        return (i, j_t[p])

    itemsize = jnp.dtype(Q.dtype).itemsize
    ni = M // tm
    flops = 2 * tm * tn * tk * num_pairs * ni
    bytes_accessed = ((tm * tk + tk * tn) * itemsize * num_pairs * ni
                      + M * N * jnp.dtype(out_dtype).itemsize)

    # Only the >512 tile config (v6e) needs more than the scoped-VMEM default.
    vmem_limit = (100 * (1 << 20)) if max(tm, tn, tk) > 512 else None

    return pl.pallas_call(
        kernel,
        out_shape=jax.ShapeDtypeStruct((M, N), out_dtype),
        grid_spec=pltpu.PrefetchScalarGridSpec(
            num_scalar_prefetch=2,
            grid=(ni, num_pairs),
            in_specs=[
                pl.BlockSpec((tm, tk), q_map),
                pl.BlockSpec((tk, tn), r_map),
            ],
            out_specs=pl.BlockSpec((tm, tn), o_map),
            scratch_shapes=[pltpu.VMEM((tm, tn), jnp.float32)],
        ),
        compiler_params=pltpu.CompilerParams(
            dimension_semantics=("parallel", "arbitrary"),
            vmem_limit_bytes=vmem_limit,
        ),
        cost_estimate=pl.CostEstimate(
            flops=flops, transcendentals=0, bytes_accessed=bytes_accessed),
    )(j_tab, k_tab, Q, R)


def qr_layer_forward(Q, R, *, r_is_upper_triangular=True, use_bf16_inputs=False):
    """Pallas implementation of QRLayer.forward(): returns Q @ R.

    r_is_upper_triangular: if True (QRLayer init convention), R blocks below
    the diagonal are skipped entirely (FLOP, DMA and grid-step savings).
    Set False if R may have become dense (e.g. unconstrained training updates
    without re-applying triu after each step).
    """
    M, K = Q.shape
    K2, N = R.shape
    assert K == K2, "inner dimensions must match"
    assert M == K == N, "QRLayer operates on square matrices"
    out_dtype = Q.dtype
    kind = _device_kind()

    if use_bf16_inputs:
        # Cheapest way to use the bf16 MXU path is to keep the parameters
        # stored in bf16 (cast once, outside the hot loop); only cast here if
        # they arrive in a wider dtype.  f32 accumulation is kept regardless.
        if Q.dtype != jnp.bfloat16:
            Q = Q.astype(jnp.bfloat16)
        if R.dtype != jnp.bfloat16:
            R = R.astype(jnp.bfloat16)

    # ---- small-matrix fast path (handles arbitrary n, incl. n=6) ----------
    if max(M, K, N) <= _SMALL_N:
        return _small_matmul(Q, R, out_dtype, kind)

    # ---- tiled MXU path with flattened triangular grid --------------------
    n = M
    t, n_pad = _select_tile(n, kind)
    if n_pad != n:
        # Zero padding preserves both the product and R's triangular zero
        # structure; result is sliced back to (n, n).
        # TODO(synk): replace padded copies with a cdiv grid + masked edge
        # stores to avoid the extra HBM round trips for ragged n.
        Qp = jnp.pad(Q, ((0, n_pad - n), (0, n_pad - n)))
        Rp = jnp.pad(R, ((0, n_pad - n), (0, n_pad - n)))
        out = _tiled_matmul(Qp, Rp, t, t, t, out_dtype=out_dtype,
                            triangular=r_is_upper_triangular, kind=kind)
        return out[:n, :n]

    return _tiled_matmul(Q, R, t, t, t, out_dtype=out_dtype,
                         triangular=r_is_upper_triangular, kind=kind)


def init_qr_params(key, n, dtype=jnp.float32):
    """Deterministic parameter init matching QRLayer.__init__ semantics:
    Q = orthogonal init of an (n, n) matrix, R = triu of randn((n, n))."""
    kq, kr = jax.random.split(key)
    a = jax.random.normal(kq, (n, n), dtype=jnp.float32)
    q, r_ = jnp.linalg.qr(a)
    # Match torch.nn.init.orthogonal_ sign convention (diag(r) positive).
    q = q * jnp.sign(jnp.diagonal(r_))[None, :]
    Q = q.astype(dtype)
    R = jnp.triu(jax.random.normal(kr, (n, n), dtype=jnp.float32)).astype(dtype)
    return Q, R


if __name__ == "__main__":
    k0, k1, k2 = jax.random.split(jax.random.PRNGKey(0), 3)

    # 1) n = 128: single-invocation small path.
    n_small = 128
    Qs, Rs = init_qr_params(k0, n_small, dtype=jnp.float32)
    out_s = jax.block_until_ready(qr_layer_forward(Qs, Rs))
    ref_s = jnp.matmul(Qs, Rs, precision=jax.lax.Precision.HIGHEST)
    assert out_s.shape == (n_small, n_small)
    assert jnp.allclose(out_s, ref_s, atol=1e-4, rtol=1e-4), "small-path mismatch"

    # 2) n = 768: flattened triangular-skip tiled path (256 tiles, grid (3, 6)).
    n_big = 768
    Qb, Rb = init_qr_params(k1, n_big, dtype=jnp.float32)
    out_b = jax.block_until_ready(qr_layer_forward(Qb, Rb))
    ref_b = jnp.matmul(Qb, Rb, precision=jax.lax.Precision.HIGHEST)
    assert out_b.shape == (n_big, n_big)
    assert jnp.allclose(out_b, ref_b, atol=2e-3, rtol=2e-3), "tiled-path mismatch"

    # 3) n = 640: ragged size -> padded to 768 with 256 tiles
    #    (exercises the no-128-tile padding path flagged in the perf review).
    n_rag = 640
    Qr, Rr = init_qr_params(k2, n_rag, dtype=jnp.float32)
    out_r = jax.block_until_ready(qr_layer_forward(Qr, Rr))
    ref_r = jnp.matmul(Qr, Rr, precision=jax.lax.Precision.HIGHEST)
    assert out_r.shape == (n_rag, n_rag)
    assert jnp.allclose(out_r, ref_r, atol=2e-3, rtol=2e-3), "padded-path mismatch"

    print("KERNEL_OK")
</pallas_src>

<mosaic_0001>
module attributes {stable_mosaic.version = 11 : i64} {
  func.func @_matmul_small_kernel(%arg0: i32, %arg1: memref<128x128xf32, #tpu.memory_space<vmem>>, %arg2: memref<128x128xf32, #tpu.memory_space<vmem>>, %arg3: memref<128x128xf32, #tpu.memory_space<vmem>>) attributes {dimension_semantics = [#tpu.dimension_semantics<parallel>], iteration_bounds = array<i64: 1>, scalar_prefetch = 0 : i64, scratch_operands = 0 : i64, tpu.core_type = #tpu.core_type<tc>, window_params = [{transform_indices = @transform_0, window_bounds = array<i64: 128, 128>}, {pipeline_mode = #tpu.pipeline_mode<synchronous>, transform_indices = @transform_1, window_bounds = array<i64: 128, 128>}, {transform_indices = @transform_2, window_bounds = array<i64: 128, 128>}]} {
    %c0 = arith.constant 0 : index
    %c0_0 = arith.constant 0 : index
    %0 = vector.load %arg1[%c0, %c0_0] : memref<128x128xf32, #tpu.memory_space<vmem>>, vector<128x128xf32>
    %c0_1 = arith.constant 0 : index
    %c0_2 = arith.constant 0 : index
    %1 = vector.load %arg2[%c0_1, %c0_2] : memref<128x128xf32, #tpu.memory_space<vmem>>, vector<128x128xf32>
    %cst = arith.constant dense<0.000000e+00> : vector<128x128xf32>
    %2 = tpu.matmul %0, %1, %cst {dimension_numbers = #tpu.dot_dimension_numbers<[1], [0], [0], [1], [0, 0, 1, 1], [], []>} : vector<128x128xf32>, vector<128x128xf32>, vector<128x128xf32> -> vector<128x128xf32>
    %c0_3 = arith.constant 0 : index
    %c0_4 = arith.constant 0 : index
    %3 = vector.load %arg3[%c0_3, %c0_4] : memref<128x128xf32, #tpu.memory_space<vmem>>, vector<128x128xf32>
    tpu.vector_store %arg3[%c0_3, %c0_4], %2 {strides = array<i32>} : memref<128x128xf32, #tpu.memory_space<vmem>>, vector<128x128xf32>,
    return
  }
  func.func @transform_0(%arg0: i32) -> (i32, i32) {
    %c0_i32 = arith.constant 0 : i32
    %c0_i32_0 = arith.constant 0 : i32
    return %arg0, %c0_i32 : i32, i32
  }
  func.func @transform_1(%arg0: i32) -> (i32, i32) {
    %c0_i32 = arith.constant 0 : i32
    %c0_i32_0 = arith.constant 0 : i32
    %c0_i32_1 = arith.constant 0 : i32
    return %c0_i32, %c0_i32_0 : i32, i32
  }
  func.func @transform_2(%arg0: i32) -> (i32, i32) {
    %c0_i32 = arith.constant 0 : i32
    %c0_i32_0 = arith.constant 0 : i32
    return %arg0, %c0_i32 : i32, i32
  }
}

</mosaic_0001>

<llo_original>
// kernel: tpu_custom_call.1
$region0: #{tpu_custom_call.1}
  #allocation0 [shape = 'u32[]', space=smem, size = 0x4, offset = 0x4, fixed_abs, tag = 'smem constant byte address 0x4 - core index']
  #allocation1 [shape = 'u32[144,128]{1,0:T(1,128)}', space=vmem, size = 0x12000, scoped, tag = 'internal scratch']
  %s0 = inlined_call_operand.hbm [shape: f32[128,128], index: 0, kind: input, shape index: {}]
  %s1 = inlined_call_operand.hbm [shape: f32[128,128], index: 1, kind: input, shape index: {}]
  %s2 = inlined_call_operand.hbm [shape: f32[128,128], index: 2, kind: output, shape index: {}]
  %s3 = sld [smem:[#allocation0]]
  $region26: #{tpu_custom_call.1} parent=0
    _
  %s5 = ssub.s32 1, %s3
  %s6 = scalar_select 0, %s5, %s3
  $region1: #{tpu_custom_call.1} parent=0
    #allocation2 [shape = 'u8[65536]{0}', space=vmem, size = 0x10000, scoped, tag = 'input window, operand 0, single buffered']
    #allocation3 [shape = 's32[1]{0}', space=sflag, size = 0x4, scoped, tag = 'scoped memory for tpu_custom_call.1']
    #allocation4 [shape = 's32[1]{0}', space=sflag, size = 0x4, scoped, tag = 'scoped memory for tpu_custom_call.1']
    #allocation5 [shape = 'u8[65536]{0}', space=vmem, size = 0x10000, scoped, tag = 'input window, operand 1, single buffered']
    #allocation6 [shape = 's32[1]{0}', space=sflag, size = 0x4, scoped, tag = 'scoped memory for tpu_custom_call.1']
    #allocation7 [shape = 'u8[65536]{0}', space=vmem, size = 0x10000, scoped, tag = 'output window, operand 0, single buffered']
    %7 = vsyncpa [#allocation3], 0
    %8 = vsyncpa [#allocation6], 0
    %9 = vsyncpa [#allocation4], 0
    // Predicated region
    $region2: #{tpu_custom_call.1} parent=1 // pred_check
      _
    $region3: #{tpu_custom_call.1} parent=1 // pred_check_branch
      %11 = sbr.rel (0) target = $region5
    $region4: #{tpu_custom_call.1} parent=1 // pred_region
      %s13 = ssub.s32 2048, 2048
      %14 = vsyncadd [#allocation3], %s13
      %s15 = sshll.u32 [#allocation2], 4
      %s16 = int_to_ptr.vmem [resolvable:$true] %s15
      %21 = dma.hbm_to_vmem [thread:$0]  %s0, 2048, %s16, [#allocation3], 128, 128, 8
    $region5: #{tpu_custom_call.1} parent=1 // pred_fallthru
      _
    // Predicated region
    $region6: #{tpu_custom_call.1} parent=1 // pred_check
      _
    $region7: #{tpu_custom_call.1} parent=1 // pred_check_branch
      %23 = sbr.rel (0) target = $region9
    $region8: #{tpu_custom_call.1} parent=1 // pred_region
      %s25 = ssub.s32 2048, 2048
      %26 = vsyncadd [#allocation6], %s25
      %s27 = sshll.u32 [#allocation5], 4
      %s28 = int_to_ptr.vmem [resolvable:$true] %s27
      %33 = dma.hbm_to_vmem [thread:$0]  %s1, 2048, %s28, [#allocation6], 128, 128, 8
    $region9: #{tpu_custom_call.1} parent=1 // pred_fallthru
      _
    // Predicated region
    $region10: #{tpu_custom_call.1} parent=1 // pred_check
      _
    $region11: #{tpu_custom_call.1} parent=1 // pred_check_branch
      %35 = sbr.rel (0) target = $region13
    $region12: #{tpu_custom_call.1} parent=1 // pred_region
      %36 = dma.done [#allocation3], 2048
    $region13: #{tpu_custom_call.1} parent=1 // pred_fallthru
      _
    // Predicated region
    $region14: #{tpu_custom_call.1} parent=1 // pred_check
      _
    $region15: #{tpu_custom_call.1} parent=1 // pred_check_branch
      %38 = sbr.rel (0) target = $region17
    $region16: #{tpu_custom_call.1} parent=1 // pred_region
      %39 = dma.done [#allocation6], 2048
    $region17: #{tpu_custom_call.1} parent=1 // pred_fallthru
      _
    %v40 = vld [vmem:[#allocation2] sm:$0xff]
    %v41 = vld [vmem:[#allocation2 + $0x8] sm:$0xff]
    %v42 = vld [vmem:[#allocation2 + $0x10] sm:$0xff]
    %v43 = vld [vmem:[#allocation2 + $0x18] sm:$0xff]
    %v44 = vld [vmem:[#allocation2 + $0x20] sm:$0xff]
    %v45 = vld [vmem:[#allocation2 + $0x28] sm:$0xff]
    %v46 = vld [vmem:[#allocation2 + $0x30] sm:$0xff]
    %v47 = vld [vmem:[#allocation2 + $0x38] sm:$0xff]
    %v48 = vld [vmem:[#allocation2 + $0x40] sm:$0xff]
    %v49 = vld [vmem:[#allocation2 + $0x48] sm:$0xff]
    %v50 = vld [vmem:[#allocation2 + $0x50] sm:$0xff]
    %v51 = vld [vmem:[#allocation2 + $0x58] sm:$0xff]
    %v52 = vld [vmem:[#allocation2 + $0x60] sm:$0xff]
    %v53 = vld [vmem:[#allocation2 + $0x68] sm:$0xff]
    %v54 = vld [vmem:[#allocation2 + $0x70] sm:$0xff]
    %v55 = vld [vmem:[#allocation2 + $0x78] sm:$0xff]
    %v56 = vld [vmem:[#allocation5] sm:$0xff]
    %v57 = vld [vmem:[#allocation5 + $0x8] sm:$0xff]
    %v58 = vld [vmem:[#allocation5 + $0x10] sm:$0xff]
    %v59 = vld [vmem:[#allocation5 + $0x18] sm:$0xff]
    %v60 = vld [vmem:[#allocation5 + $0x20] sm:$0xff]
    %v61 = vld [vmem:[#allocation5 + $0x28] sm:$0xff]
    %v62 = vld [vmem:[#allocation5 + $0x30] sm:$0xff]
    %v63 = vld [vmem:[#allocation5 + $0x38] sm:$0xff]
    %v64 = vld [vmem:[#allocation5 + $0x40] sm:$0xff]
    %v65 = vld [vmem:[#allocation5 + $0x48] sm:$0xff]
    %v66 = vld [vmem:[#allocation5 + $0x50] sm:$0xff]
    %v67 = vld [vmem:[#allocation5 + $0x58] sm:$0xff]
    %v68 = vld [vmem:[#allocation5 + $0x60] sm:$0xff]
    %v69 = vld [vmem:[#allocation5 + $0x68] sm:$0xff]
    %v70 = vld [vmem:[#allocation5 + $0x70] sm:$0xff]
    %v71 = vld [vmem:[#allocation5 + $0x78] sm:$0xff]
    %72 = vmatprep.subr.mxu0 0.0
    %73 = vmatpush1.msra.mxu0 %v56
    %74 = vmatprep.subr.mxu0 0.0
    %75 = vmatpush1.msra.mxu0 %v57
    %76 = vmatprep.subr.mxu0 0.0
    %77 = vmatpush1.msra.mxu0 %v58
    %78 = vmatprep.subr.mxu0 0.0
    %79 = vmatpush1.msra.mxu0 %v59
    %80 = vmatprep.subr.mxu0 0.0
    %81 = vmatpush1.msra.mxu0 %v60
    %82 = vmatprep.subr.mxu0 0.0
    %83 = vmatpush1.msra.mxu0 %v61
    %84 = vmatprep.subr.mxu0 0.0
    %85 = vmatpush1.msra.mxu0 %v62
    %86 = vmatprep.subr.mxu0 0.0
    %87 = vmatpush1.msra.mxu0 %v63
    %88 = vmatprep.subr.mxu0 0.0
    %89 = vmatpush1.msra.mxu0 %v64
    %90 = vmatprep.subr.mxu0 0.0
    %91 = vmatpush1.msra.mxu0 %v65
    %92 = vmatprep.subr.mxu0 0.0
    %93 = vmatpush1.msra.mxu0 %v66
    %94 = vmatprep.subr.mxu0 0.0
    %95 = vmatpush1.msra.mxu0 %v67
    %96 = vmatprep.subr.mxu0 0.0
    %97 = vmatpush1.msra.mxu0 %v68
    %98 = vmatprep.subr.mxu0 0.0
    %99 = vmatpush1.msra.mxu0 %v69
    %100 = vmatprep.subr.mxu0 0.0
    %101 = vmatpush1.msra.mxu0 %v70
    %102 = vmatprep.subr.mxu0 0.0
    %103 = vmatpush1.msra.mxu0 %v71
    %104 = vmatprep.subr.mxu0 0.0
    %105 = vmatpush1.msra.mxu0 0.0
    %106 = vmatprep.subr.mxu0 0.0
    %107 = vmatpush1.msra.mxu0 0.0
    %108 = vmatprep.subr.mxu0 0.0
    %109 = vmatpush1.msra.mxu0 0.0
    %110 = vmatprep.subr.mxu0 0.0
    %111 = vmatpush1.msra.mxu0 0.0
    %112 = vmatprep.subr.mxu0 0.0
    %113 = vmatpush1.msra.mxu0 0.0
    %114 = vmatprep.subr.mxu0 0.0
    %115 = vmatpush1.msra.mxu0 0.0
    %116 = vmatprep.subr.mxu0 0.0
    %117 = vmatpush1.msra.mxu0 0.0
    %118 = vmatprep.subr.mxu0 0.0
    %119 = vmatpush1.msra.mxu0 0.0
    %120 = vmatprep.subr.mxu0 0.0
    %121 = vmatpush1.msra.mxu0 0.0
    %122 = vmatprep.subr.mxu0 0.0
    %123 = vmatpush1.msra.mxu0 0.0
    %124 = vmatprep.subr.mxu0 0.0
    %125 = vmatpush1.msra.mxu0 0.0
    %126 = vmatprep.subr.mxu0 0.0
    %127 = vmatpush1.msra.mxu0 0.0
    %128 = vmatprep.subr.mxu0 0.0
    %129 = vmatpush1.msra.mxu0 0.0
    %130 = vmatprep.subr.mxu0 0.0
    %131 = vmatpush1.msra.mxu0 0.0
    %132 = vmatprep.subr.mxu0 0.0
    %133 = vmatpush1.msra.mxu0 0.0
    %134 = vmatprep.subr.mxu0 0.0
    %135 = vmatpush1.msra.mxu0 0.0
    %136 = vmatprep.mubr.f32.mxu0 0.0
    %137 = vmatmul.mubr.f32.gmra.mrb[0].mxu0 %v40
    %v138 = vpop.f32.mrb[0].mxu0
    %v139 = vadd.f32 0.0, %v138
    %v140 = vpop.f32.mrb[0].mxu0
    %141 = vmatprep.mubr.f32.mxu0 0.0
    %142 = vmatmul.mubr.f32.gmra.mrb[0].mxu0 %v41
    %v143 = vpop.f32.mrb[0].mxu0
    %v144 = vadd.f32 0.0, %v143
    %v145 = vpop.f32.mrb[0].mxu0
    %146 = vmatprep.mubr.f32.mxu0 0.0
    %147 = vmatmul.mubr.f32.gmra.mrb[0].mxu0 %v42
    %v148 = vpop.f32.mrb[0].mxu0
    %v149 = vadd.f32 0.0, %v148
    %v150 = vpop.f32.mrb[0].mxu0
    %151 = vmatprep.mubr.f32.mxu0 0.0
    %152 = vmatmul.mubr.f32.gmra.mrb[0].mxu0 %v43
    %v153 = vpop.f32.mrb[0].mxu0
    %v154 = vadd.f32 0.0, %v153
    %v155 = vpop.f32.mrb[0].mxu0
    %156 = vmatprep.mubr.f32.mxu0 0.0
    %157 = vmatmul.mubr.f32.gmra.mrb[0].mxu0 %v44
    %v158 = vpop.f32.mrb[0].mxu0
    %v159 = vadd.f32 0.0, %v158
    %v160 = vpop.f32.mrb[0].mxu0
    %161 = vmatprep.mubr.f32.mxu0 0.0
    %162 = vmatmul.mubr.f32.gmra.mrb[0].mxu0 %v45
    %v163 = vpop.f32.mrb[0].mxu0
    %v164 = vadd.f32 0.0, %v163
    %v165 = vpop.f32.mrb[0].mxu0
    %166 = vmatprep.mubr.f32.mxu0 0.0
    %167 = vmatmul.mubr.f32.gmra.mrb[0].mxu0 %v46
    %v168 = vpop.f32.mrb[0].mxu0
    %v169 = vadd.f32 0.0, %v168
    %v170 = vpop.f32.mrb[0].mxu0
    %171 = vmatprep.mubr.f32.mxu0 0.0
    %172 = vmatmul.mubr.f32.gmra.mrb[0].mxu0 %v47
    %v173 = vpop.f32.mrb[0].mxu0
    %v174 = vadd.f32 0.0, %v173
    %v175 = vpop.f32.mrb[0].mxu0
    %176 = vmatprep.mubr.f32.mxu0 0.0
    %177 = vmatmul.mubr.f32.gmra.mrb[0].mxu0 %v48
    %v178 = vpop.f32.mrb[0].mxu0
    %v179 = vadd.f32 0.0, %v178
    %v180 = vpop.f32.mrb[0].mxu0
    %181 = vmatprep.mubr.f32.mxu0 0.0
    %182 = vmatmul.mubr.f32.gmra.mrb[0].mxu0 %v49
    %v183 = vpop.f32.mrb[0].mxu0
    %v184 = vadd.f32 0.0, %v183
    %v185 = vpop.f32.mrb[0].mxu0
    %186 = vmatprep.mubr.f32.mxu0 0.0
    %187 = vmatmul.mubr.f32.gmra.mrb[0].mxu0 %v50
    %v188 = vpop.f32.mrb[0].mxu0
    %v189 = vadd.f32 0.0, %v188
    %v190 = vpop.f32.mrb[0].mxu0
    %191 = vmatprep.mubr.f32.mxu0 0.0
    %192 = vmatmul.mubr.f32.gmra.mrb[0].mxu0 %v51
    %v193 = vpop.f32.mrb[0].mxu0
    %v194 = vadd.f32 0.0, %v193
    %v195 = vpop.f32.mrb[0].mxu0
    %196 = vmatprep.mubr.f32.mxu0 0.0
    %197 = vmatmul.mubr.f32.gmra.mrb[0].mxu0 %v52
    %v198 = vpop.f32.mrb[0].mxu0
    %v199 = vadd.f32 0.0, %v198
    %v200 = vpop.f32.mrb[0].mxu0
    %201 = vmatprep.mubr.f32.mxu0 0.0
    %202 = vmatmul.mubr.f32.gmra.mrb[0].mxu0 %v53
    %v203 = vpop.f32.mrb[0].mxu0
    %v204 = vadd.f32 0.0, %v203
    %v205 = vpop.f32.mrb[0].mxu0
    %206 = vmatprep.mubr.f32.mxu0 0.0
    %207 = vmatmul.mubr.f32.gmra.mrb[0].mxu0 %v54
    %v208 = vpop.f32.mrb[0].mxu0
    %v209 = vadd.f32 0.0, %v208
    %v210 = vpop.f32.mrb[0].mxu0
    %211 = vmatprep.mubr.f32.mxu0 0.0
    %212 = vmatmul.mubr.f32.gmra.mrb[0].mxu0 %v55
    %v213 = vpop.f32.mrb[0].mxu0
    %v214 = vadd.f32 0.0, %v213
    %v215 = vpop.f32.mrb[0].mxu0
    %216 = vdwg.mxu0
    %217 = vst [vmem:[#allocation7] sm:$0xff] %v139
    %218 = vst [vmem:[#allocation7 + $0x8] sm:$0xff] %v144
    %219 = vst [vmem:[#allocation7 + $0x10] sm:$0xff] %v149
    %220 = vst [vmem:[#allocation7 + $0x18] sm:$0xff] %v154
    %221 = vst [vmem:[#allocation7 + $0x20] sm:$0xff] %v159
    %222 = vst [vmem:[#allocation7 + $0x28] sm:$0xff] %v164
    %223 = vst [vmem:[#allocation7 + $0x30] sm:$0xff] %v169
    %224 = vst [vmem:[#allocation7 + $0x38] sm:$0xff] %v174
    %225 = vst [vmem:[#allocation7 + $0x40] sm:$0xff] %v179
    %226 = vst [vmem:[#allocation7 + $0x48] sm:$0xff] %v184
    %227 = vst [vmem:[#allocation7 + $0x50] sm:$0xff] %v189
    %228 = vst [vmem:[#allocation7 + $0x58] sm:$0xff] %v194
    %229 = vst [vmem:[#allocation7 + $0x60] sm:$0xff] %v199
    %230 = vst [vmem:[#allocation7 + $0x68] sm:$0xff] %v204
    %231 = vst [vmem:[#allocation7 + $0x70] sm:$0xff] %v209
    %232 = vst [vmem:[#allocation7 + $0x78] sm:$0xff] %v214
    // Predicated region
    $region18: #{tpu_custom_call.1} parent=1 // pred_check
      _
    $region19: #{tpu_custom_call.1} parent=1 // pred_check_branch
      %234 = sbr.rel (0) target = $region21
    $region20: #{tpu_custom_call.1} parent=1 // pred_region
      %s236 = ssub.s32 2048, 2048
      %237 = vsyncadd [#allocation4], %s236
      %s238 = sshll.u32 [#allocation7], 4
      %s239 = int_to_ptr.vmem [resolvable:$true] %s238
      %244 = dma.vmem_to_hbm [thread:$0]  %s239, 2048, %s2, [#allocation4], 128, 128, 8
    $region21: #{tpu_custom_call.1} parent=1 // pred_fallthru
      _
    // Predicated region
    $region22: #{tpu_custom_call.1} parent=1 // pred_check
      _
    $region23: #{tpu_custom_call.1} parent=1 // pred_check_branch
      %246 = sbr.rel (0) target = $region25
    $region24: #{tpu_custom_call.1} parent=1 // pred_region
      %247 = dma.done [#allocation4], 2048
    $region25: #{tpu_custom_call.1} parent=1 // pred_fallthru
      _
    %248 = vsyncpa [#allocation3], 1
    %249 = vsyncpa [#allocation6], 1
    %250 = vsyncpa [#allocation4], 1

</llo_original>
